<compile_context>
chip_gen: v5e
topology: v5e:2x2
jax: 0.10.0
libtpu: 0.0.40
codegen_flags: <defaults>
</compile_context>

<pallas_src>
import functools
import math

import jax
import jax.numpy as jnp
from jax.experimental import pallas as pl
from jax.experimental.pallas import tpu as pltpu


# ---------------------------------------------------------------------------
# pe buffer (register_buffer analog): cached per (seq_len, embed_dim), float32.
# ---------------------------------------------------------------------------
@functools.lru_cache(maxsize=None)
def _pe_table(seq_len: int, embed_dim: int) -> jax.Array:
    position = jnp.arange(seq_len, dtype=jnp.float32)[:, None]            # (S, 1)
    div_term = jnp.exp(jnp.arange(0, embed_dim, 2, dtype=jnp.float32)
                       * (-math.log(10000.0) / embed_dim))                # (ceil(D/2),)
    angles = position * div_term                                          # (S, ceil(D/2))
    # Interleave sin/cos via stack+reshape (no scatter passes); slice handles odd D.
    inter = jnp.stack([jnp.sin(angles), jnp.cos(angles)], axis=-1)        # (S, ceil(D/2), 2)
    return inter.reshape(seq_len, -1)[:, :embed_dim]                      # (S, D) float32


# ---------------------------------------------------------------------------
# Tiling helpers.
# ---------------------------------------------------------------------------
def _generation_params():
    """(target bytes per x/out block, vmem_limit_bytes override or None)."""
    kind = ""
    try:
        kind = jax.devices()[0].device_kind.lower()
    except Exception:
        pass
    if "v6" in kind:
        # Bigger tiles amortize the ~0.35us/step cost; 128 MiB physical VMEM,
        # raise scoped limit so double-buffered x+out+pe fits comfortably.
        return 6 * 1024 * 1024, 64 * 1024 * 1024
    if "v7" in kind:
        # v7x: 64 MiB physical; 4 MiB tiles keep 2*(x+out+pe) inside the
        # 32 MiB default scoped limit.
        return 4 * 1024 * 1024, None
    # v5e (16 MiB default scoped VMEM) and unknown chips: stay conservative.
    return 2 * 1024 * 1024, None


def _fold(S: int, D: int):
    """Factor S*D into rows x lanes with lanes a multiple of 128 when possible."""
    L = S * D
    if L % 128 == 0:
        return L // 128, 128          # lane-dense stores, max row granularity
    return S, D                       # fallback: natural layout (last dim = D)


def _choose_tiles(B: int, R: int, W: int, itemsize: int, target_bytes: int):
    """Pick (batch_tile, row_tile): block ~ target bytes, sublane-dense rows."""
    row_bytes = W * itemsize
    # Batch tile: keep room for >=8 rows within budget (handles very large B).
    tb = max(1, min(B, target_bytes // max(1, 8 * row_bytes)))
    # Row tile: fill the remaining budget; multiple of 8 for full sublanes.
    tr = max(1, target_bytes // max(1, tb * row_bytes))
    tr = min(tr, R)
    if R >= 8:
        tr = max(8, (tr // 8) * 8)
        # Keep >=2 row blocks when there is room so dimension_semantics
        # ("parallel", ...) can shard across v7x's two TensorCores.
        if tr >= R and R >= 16:
            tr = max(8, (((R + 1) // 2) // 8) * 8)
    else:
        tr = R                        # tiny input: full-dim block (still legal)
    return tb, tr


# ---------------------------------------------------------------------------
# Kernel + forward.
# ---------------------------------------------------------------------------
def _add_pe_kernel(x_ref, pe_ref, o_ref):
    # x_ref/o_ref: (TB, TR, W); pe_ref: (1, TR, W) float32, broadcast over batch
    # along the leading (non-sublane) dim.  Pure VPU add -> HBM-bound.
    o_ref[...] = (x_ref[...].astype(jnp.float32) + pe_ref[...]).astype(o_ref.dtype)


@jax.jit
def _forward(x: jax.Array, pe: jax.Array) -> jax.Array:
    B, S, D = x.shape
    out_dtype = jnp.promote_types(x.dtype, pe.dtype)     # PyTorch: add promotes to f32

    R, W = _fold(S, D)
    x3 = x.reshape(B, R, W)                              # contiguous view, free
    pe3 = pe.reshape(1, R, W)

    target_bytes, vmem_limit = _generation_params()
    tb, tr = _choose_tiles(B, R, W, jnp.dtype(out_dtype).itemsize, target_bytes)
    # Rows outer, batch inner: pe's block index is constant across the inner
    # axis, so its tile is reused (total pe traffic stays ~S*D, not B*S*D).
    grid = (pl.cdiv(R, tr), pl.cdiv(B, tb))

    cp_kwargs = dict(dimension_semantics=("parallel", "parallel"))
    if vmem_limit is not None:
        cp_kwargs["vmem_limit_bytes"] = vmem_limit

    # TODO(synk): callers that donate x (and keep f32) could add
    # input_output_aliases={0: 0} to write in place and save the extra HBM alloc.
    out = pl.pallas_call(
        _add_pe_kernel,
        out_shape=jax.ShapeDtypeStruct((B, R, W), out_dtype),
        grid_spec=pltpu.PrefetchScalarGridSpec(
            num_scalar_prefetch=0,
            grid=grid,
            in_specs=[
                pl.BlockSpec((tb, tr, W), lambda r, b: (b, r, 0)),   # x tile
                pl.BlockSpec((1, tr, W), lambda r, b: (0, r, 0)),    # pe tile (batch-shared)
            ],
            out_specs=pl.BlockSpec((tb, tr, W), lambda r, b: (b, r, 0)),
        ),
        compiler_params=pltpu.CompilerParams(**cp_kwargs),
    )(x3, pe3)
    return out.reshape(B, S, D)


class SinusoidalEmbedding:
    """JAX/Pallas port of the PyTorch module: forward(x) = x + pe."""

    def __init__(self, embed_dim: int, seq_len: int = 5000):
        self.embed_dim = embed_dim
        self.seq_len = seq_len
        self.pe = _pe_table(seq_len, embed_dim)           # float32 (S, D) buffer

    def __call__(self, x: jax.Array) -> jax.Array:
        B, S, D = x.shape
        assert D == self.embed_dim and S <= self.seq_len
        pe = self.pe if S == self.seq_len else self.pe[:S]
        return _forward(x, pe)


# ---------------------------------------------------------------------------
# Pure-JAX reference mirroring the PyTorch module (f32 buffer, promoting add).
# ---------------------------------------------------------------------------
def _reference(x: jax.Array) -> jax.Array:
    B, S, D = x.shape
    position = jnp.arange(S, dtype=jnp.float32)[:, None]
    div_term = jnp.exp(jnp.arange(0, D, 2, dtype=jnp.float32)
                       * (-math.log(10000.0) / D))
    sin = jnp.sin(position * div_term)
    cos = jnp.cos(position * div_term)
    pe = jnp.zeros((1, S, D), dtype=jnp.float32)
    pe = pe.at[0, :, 0::2].set(sin)
    pe = pe.at[0, :, 1::2].set(cos[:, :D // 2])
    return x + pe


if __name__ == "__main__":
    key = jax.random.PRNGKey(0)

    # Main shape: batch=2, seq_len=8, embed_dim=32 (matches the module spec).
    B, S, D = 2, 8, 32
    mod = SinusoidalEmbedding(embed_dim=D, seq_len=S)
    x = jax.random.normal(key, (B, S, D), dtype=jnp.float32)
    out = jax.block_until_ready(mod(x))
    ref = _reference(x)
    assert out.shape == (B, S, D) and out.dtype == ref.dtype
    assert jnp.allclose(out, ref, atol=1e-5, rtol=1e-5)

    # Second shape: exercises multi-step grid, sublane-dense row tiling and a
    # masked partial row block (R = 60*32/128 = 15 rows, tiled by 8).
    B2, S2, D2 = 3, 60, 32
    mod2 = SinusoidalEmbedding(embed_dim=D2, seq_len=S2)
    x2 = jax.random.normal(jax.random.PRNGKey(1), (B2, S2, D2), dtype=jnp.float32)
    out2 = jax.block_until_ready(mod2(x2))
    assert jnp.allclose(out2, _reference(x2), atol=1e-5, rtol=1e-5)

    print("KERNEL_OK")
</pallas_src>

<mosaic_0001>
module attributes {stable_mosaic.version = 11 : i64} {
  func.func @_add_pe_kernel(%arg0: i32, %arg1: i32, %arg2: memref<2x2x128xf32, #tpu.memory_space<vmem>>, %arg3: memref<1x2x128xf32, #tpu.memory_space<vmem>>, %arg4: memref<2x2x128xf32, #tpu.memory_space<vmem>>) attributes {dimension_semantics = [#tpu.dimension_semantics<parallel>, #tpu.dimension_semantics<parallel>], iteration_bounds = array<i64: 1, 1>, scalar_prefetch = 0 : i64, scratch_operands = 0 : i64, tpu.core_type = #tpu.core_type<tc>, window_params = [{transform_indices = @transform_0, window_bounds = array<i64: 2, 2, 128>}, {transform_indices = @transform_1, window_bounds = array<i64: 1, 2, 128>}, {transform_indices = @transform_2, window_bounds = array<i64: 2, 2, 128>}]} {
    %c0 = arith.constant 0 : index
    %c0_0 = arith.constant 0 : index
    %c0_1 = arith.constant 0 : index
    %0 = vector.load %arg2[%c0, %c0_0, %c0_1] : memref<2x2x128xf32, #tpu.memory_space<vmem>>, vector<2x2x128xf32>
    %c0_2 = arith.constant 0 : index
    %c0_3 = arith.constant 0 : index
    %c0_4 = arith.constant 0 : index
    %1 = vector.load %arg3[%c0_2, %c0_3, %c0_4] : memref<1x2x128xf32, #tpu.memory_space<vmem>>, vector<1x2x128xf32>
    %2 = vector.broadcast %1 : vector<1x2x128xf32> to vector<2x2x128xf32>
    %3 = arith.addf %0, %2 : vector<2x2x128xf32>
    %c0_5 = arith.constant 0 : index
    %c0_6 = arith.constant 0 : index
    %c0_7 = arith.constant 0 : index
    %4 = vector.load %arg4[%c0_5, %c0_6, %c0_7] : memref<2x2x128xf32, #tpu.memory_space<vmem>>, vector<2x2x128xf32>
    tpu.vector_store %arg4[%c0_5, %c0_6, %c0_7], %3 {strides = array<i32>} : memref<2x2x128xf32, #tpu.memory_space<vmem>>, vector<2x2x128xf32>,
    return
  }
  func.func @transform_0(%arg0: i32, %arg1: i32) -> (i32, i32, i32) {
    %c0_i32 = arith.constant 0 : i32
    %c0_i32_0 = arith.constant 0 : i32
    return %arg1, %arg0, %c0_i32 : i32, i32, i32
  }
  func.func @transform_1(%arg0: i32, %arg1: i32) -> (i32, i32, i32) {
    %c0_i32 = arith.constant 0 : i32
    %c0_i32_0 = arith.constant 0 : i32
    %c0_i32_1 = arith.constant 0 : i32
    return %c0_i32, %arg0, %c0_i32_0 : i32, i32, i32
  }
  func.func @transform_2(%arg0: i32, %arg1: i32) -> (i32, i32, i32) {
    %c0_i32 = arith.constant 0 : i32
    %c0_i32_0 = arith.constant 0 : i32
    return %arg1, %arg0, %c0_i32 : i32, i32, i32
  }
}

</mosaic_0001>

<llo_original>
// kernel: _forward.1
$region0: #{_forward.1}
  #allocation0 [shape = 'u32[]', space=smem, size = 0x4, offset = 0x4, fixed_abs, tag = 'smem constant byte address 0x4 - core index']
  #allocation1 [shape = 'u32[72,128]{1,0:T(1,128)}', space=vmem, size = 0x9000, scoped, tag = 'internal scratch']
  %s0 = inlined_call_operand.vmem [shape: f32[2,2,128], index: 0, kind: input, shape index: {}]
  %s1 = inlined_call_operand.vmem [shape: f32[1,2,128], index: 1, kind: input, shape index: {}]
  %s2 = inlined_call_operand.vmem [shape: f32[2,2,128], index: 2, kind: output, shape index: {}]
  %s3 = sld [smem:[#allocation0]]
  $region18: #{_forward.1} parent=0
    _
  %s5 = ssub.s32 1, %s3
  %s6 = scalar_select 0, %s5, %s3
  // Predicated region
  $region2: #{_forward.1} parent=0 // pred_check
    _
  $region3: #{_forward.1} parent=0 // pred_check_branch
    %8 = sbr.rel (0) target = $region5
  $region4: #{_forward.1} parent=0 // pred_region
    _
  $region5: #{_forward.1} parent=0 // pred_fallthru
    _
  // Predicated region
  $region6: #{_forward.1} parent=0 // pred_check
    _
  $region7: #{_forward.1} parent=0 // pred_check_branch
    %10 = sbr.rel (0) target = $region9
  $region8: #{_forward.1} parent=0 // pred_region
    _
  $region9: #{_forward.1} parent=0 // pred_fallthru
    _
  %v11 = vld [vmem:[%s0] sm:$0x3]
  %v12 = vld [vmem:[%s0 + $0x2] sm:$0x3]
  %v13 = vld [vmem:[%s1] sm:$0x3]
  %v14 = vadd.f32 %v11, %v13
  %v15 = vadd.f32 %v12, %v13
  %16 = vst [vmem:[%s2] sm:$0x3] %v14
  %17 = vst [vmem:[%s2 + $0x2] sm:$0x3] %v15
  // Predicated region
  $region10: #{_forward.1} parent=0 // pred_check
    _
  $region11: #{_forward.1} parent=0 // pred_check_branch
    %19 = sbr.rel (0) target = $region13
  $region12: #{_forward.1} parent=0 // pred_region
    _
  $region13: #{_forward.1} parent=0 // pred_fallthru
    _
  // Predicated region
  $region14: #{_forward.1} parent=0 // pred_check
    _
  $region15: #{_forward.1} parent=0 // pred_check_branch
    %21 = sbr.rel (0) target = $region17
  $region16: #{_forward.1} parent=0 // pred_region
    _
  $region17: #{_forward.1} parent=0 // pred_fallthru
    _

</llo_original>
